<compile_context>
chip_gen: v6e
topology: v6e:2x2x1
jax: 0.10.0
libtpu: 0.0.40
codegen_flags: <defaults>
</compile_context>

<pallas_src>
import functools

import jax
import jax.numpy as jnp
import numpy as np
from jax.experimental import pallas as pl
from jax.experimental.pallas import tpu as pltpu

_EPS = 1e-7                 # hsf_from_phi default (used by the pure-JAX reference)
_TILE_ROWS = 2048           # default batch tile (safe for v7x's 64 MiB VMEM); v6e/v5e can
                            # pass tile_rows=4096-8192 together with a larger vmem limit
_MIN_ROWS_TO_SPLIT = 2048   # above this, force >= 2 grid steps so both v7x TCs get work


def _round_up(x, m):
    return ((x + m - 1) // m) * m


def _mid_values(cuts):
    cuts = np.asarray(cuts, dtype=np.float32)
    mids = 0.5 * (cuts[:-1] + cuts[1:])
    last = np.asarray([cuts[-1] + 0.5 * (cuts[-1] - cuts[-2])], dtype=np.float32)
    return np.concatenate([mids, last]).astype(np.float32)


def _loss_haz_cls_ind_kernel(phi_ref, tgt_ref, mid_ref, tri_ref, out_ref, *, n_total):
    tile_n = phi_ref.shape[0]
    t_bins = phi_ref.shape[1] - 1

    full = phi_ref[...].astype(jnp.float32)      # [tile, T+1] cast-on-load
    tgt = tgt_ref[...].astype(jnp.float32)       # [tile, 4]
    mid = mid_ref[...].astype(jnp.float32)       # [1, T]
    tri = tri_ref[...]                           # [T, T] f32, tri[k, j] = 1 iff k <= j

    phi = full[:, :t_bins]                       # [tile, T] hazard logits
    ind_sv = full[:, t_bins:t_bins + 1]          # [tile, 1] individual-regression head

    idx = tgt[:, 0:1].astype(jnp.int32)          # [tile, 1] duration-bin index
    ev = tgt[:, 1:2]                             # [tile, 1] event indicator
    t_ind = tgt[:, 2:3]                          # [tile, 1] individual target
    t_org = tgt[:, 3:4]                          # [tile, 1] original-event filter

    # Mask rows past N (ragged last tile) out of every partial sum (selects, not multiplies,
    # so NaN/Inf in undefined padding rows cannot leak).
    rows = (pl.program_id(0) * tile_n
            + jax.lax.broadcasted_iota(jnp.int32, (tile_n, 1), 0))
    valid = rows < n_total                       # [tile, 1] bool

    # ---- shared transcendental chain (one exp + one log1p feed everything below) ----
    #   lp     = log1p(exp(-|phi|))          = softplus(-|phi|)
    #   bce    = max(phi,0) - phi*y + lp     (numerically stable BCE-with-logits)
    #   log1mh = -(max(phi,0) + lp)          = log(1 - sigmoid(phi))
    #   logh   = min(phi,0) - lp             = log(sigmoid(phi))
    #   f      = exp(logh + cumsum(log1mh))  = h * S  (pmf), single exp, no reciprocal
    # TODO(synk): hsf_from_phi clamps with log(1-h+eps); the -softplus(phi) form drops that
    # eps (differs only when sigmoid saturates, ~1e-7-scale effect on the scalar loss).
    phi_pos = jnp.maximum(phi, 0.0)
    lp = jnp.log1p(jnp.exp(-jnp.abs(phi)))

    # ---- NLLLogistiHazardLoss numerator: sum_i sum_{j<=idx_i} BCE(phi_ij, ev_i*[j==idx_i]) ----
    # TODO(synk): idx_durations == T (out of range) silently acts like an event-free row here,
    # whereas torch scatter would raise.
    col = jax.lax.broadcasted_iota(jnp.int32, (tile_n, t_bins), 1)
    y = jnp.where(col == idx, ev, 0.0)
    bce = phi_pos - phi * y + lp
    surv_mask = jnp.logical_and(col <= idx, valid)
    surv_sum = jnp.sum(jnp.where(surv_mask, bce, 0.0))

    # ---- hsf_from_phi: pmf f = h * S, expected individual value ----
    log1mh = -(phi_pos + lp)
    logh = jnp.minimum(phi, 0.0) - lp
    # time-axis cumsum as a matmul against the constant triangular matrix (idle MXU, f32)
    log_s = jnp.dot(log1mh, tri, preferred_element_type=jnp.float32)
    f = jnp.exp(logh + log_s)                              # [tile, T] pmf
    ind_sv_e = jnp.sum(f * mid, axis=1, keepdims=True)     # [tile, 1]

    # ---- MSELossFilter terms (filtered by original event indicator) ----
    count_mask = jnp.logical_and(t_org > 0.0, valid)       # [tile, 1] bool
    hs_sum = jnp.sum(jnp.where(count_mask, 1.0, 0.0))
    se_sum = jnp.sum(jnp.where(count_mask, (ind_sv - t_ind) ** 2, 0.0))
    se_e_sum = jnp.sum(jnp.where(count_mask, (ind_sv_e - t_ind) ** 2, 0.0))

    # ---- lane-dense per-tile partial-sum row: [surv, se, se_e, hs, 0...] ----
    lane = jax.lax.broadcasted_iota(jnp.int32, (1, 1, 128), 2)
    out_ref[...] = jnp.where(
        lane == 0, surv_sum,
        jnp.where(lane == 1, se_sum,
                  jnp.where(lane == 2, se_e_sum,
                            jnp.where(lane == 3, hs_sum, 0.0)))).astype(jnp.float32)


def loss_haz_cls_ind(phi_full, target_loghaz, *, cuts, alpha=0.5,
                     tile_rows=_TILE_ROWS, vmem_limit_bytes=48 * 1024 * 1024):
    """JAX/Pallas equivalent of LossHazClsInd(alpha=alpha, cuts=cuts).forward(phi, target)."""
    n, tp1 = phi_full.shape
    t_bins = tp1 - 1
    c_tgt = target_loghaz.shape[1]

    mids = _mid_values(cuts)
    assert mids.shape[0] == t_bins, "len(cuts) must equal the number of hazard bins"
    mid_vals = jnp.asarray(mids).reshape(1, t_bins)
    # tri[k, j] = 1 iff k <= j  ->  (log1mh @ tri)[i, j] = cumsum over time of log1mh[i, :j]
    tri = jnp.asarray(np.triu(np.ones((t_bins, t_bins), dtype=np.float32)))

    tile_n = min(_round_up(tile_rows, 8), _round_up(n, 8))
    num_tiles = pl.cdiv(n, tile_n)
    if num_tiles == 1 and n >= _MIN_ROWS_TO_SPLIT:
        # v7x has 2 TensorCores: the "parallel" batch axis only shards if there are >= 2 steps.
        tile_n = _round_up(pl.cdiv(n, 2), 8)
        num_tiles = pl.cdiv(n, tile_n)

    kernel = functools.partial(_loss_haz_cls_ind_kernel, n_total=n)
    partials = pl.pallas_call(
        kernel,
        out_shape=jax.ShapeDtypeStruct((num_tiles, 1, 128), jnp.float32),
        grid=(num_tiles,),
        in_specs=[
            pl.BlockSpec((tile_n, tp1), lambda i: (i, 0)),
            pl.BlockSpec((tile_n, c_tgt), lambda i: (i, 0)),
            pl.BlockSpec((1, t_bins), lambda i: (0, 0)),          # mid values, resident
            pl.BlockSpec((t_bins, t_bins), lambda i: (0, 0)),      # tri constant, resident
        ],
        out_specs=pl.BlockSpec((1, 1, 128), lambda i: (i, 0, 0)),
        compiler_params=pltpu.CompilerParams(
            dimension_semantics=("parallel",),
            vmem_limit_bytes=vmem_limit_bytes),
    )(phi_full, target_loghaz, mid_vals, tri)

    sums = jnp.sum(partials, axis=(0, 1))        # [128] cross-tile reduce (tiny, plain JAX)
    loss_surv = sums[0] / jnp.float32(n)
    hs_sum = sums[3]
    loss_mse = sums[1] / hs_sum
    loss_mse_e = sums[2] / hs_sum
    # TODO(synk): the reference passes `target_loghaz[2:]` (a batch-row slice) to MSELossFilter,
    # which errors/broadcasts in PyTorch; the intended per-sample filtered MSE over columns
    # [t_ind_sv, t_org_event] is implemented. The right_censoring_loss=True branch (default
    # False) is not reproduced.
    return loss_surv * alpha + 0.5 * (loss_mse + loss_mse_e) * (1.0 - alpha)


def _reference(phi_full, target_loghaz, cuts, alpha):
    """Pure-JAX transcription of LossHazClsInd.forward (intended semantics)."""
    phi = phi_full[:, :-1].astype(jnp.float32)
    ind_sv = phi_full[:, -1].astype(jnp.float32)
    idx = target_loghaz[:, 0].astype(jnp.int32)
    ev = target_loghaz[:, 1].astype(jnp.float32)
    t_ind = target_loghaz[:, 2].astype(jnp.float32)
    t_org = target_loghaz[:, 3].astype(jnp.float32)
    n, t = phi.shape

    col = jnp.arange(t, dtype=jnp.int32)[None, :]
    y = jnp.where(col == idx[:, None], ev[:, None], 0.0)
    bce = jnp.maximum(phi, 0.0) - phi * y + jnp.log1p(jnp.exp(-jnp.abs(phi)))
    loss_surv = jnp.mean(jnp.sum(jnp.where(col <= idx[:, None], bce, 0.0), axis=1))

    h = jax.nn.sigmoid(phi)
    s = jnp.exp(jnp.cumsum(jnp.log(1.0 - h + _EPS), axis=1))
    f = h * s
    mids = jnp.asarray(_mid_values(cuts))
    ind_sv_e = jnp.sum(f * mids[None, :], axis=1)

    hs = (t_org > 0).astype(jnp.float32)
    loss_mse = jnp.sum((ind_sv - t_ind) ** 2 * hs) / jnp.sum(hs)
    loss_mse_e = jnp.sum((ind_sv_e - t_ind) ** 2 * hs) / jnp.sum(hs)
    return loss_surv * alpha + 0.5 * (loss_mse + loss_mse_e) * (1.0 - alpha)


def _make_inputs(key, n, t):
    k1, k2, k3, k4, k5 = jax.random.split(key, 5)
    phi_full = jax.random.normal(k1, (n, t + 1), dtype=jnp.float32)
    idx_durations = jax.random.randint(k2, (n,), 0, t)
    events = jax.random.bernoulli(k3, 0.6, (n,)).astype(jnp.float32)
    t_ind_sv = jax.random.uniform(k4, (n,), minval=0.0, maxval=5.0)
    t_org_event = jax.random.bernoulli(k5, 0.7, (n,)).astype(jnp.float32)
    t_org_event = t_org_event.at[0].set(1.0)   # guarantee sum(hs) > 0
    target_loghaz = jnp.stack(
        [idx_durations.astype(jnp.float32), events, t_ind_sv, t_org_event], axis=1)
    return phi_full, target_loghaz


if __name__ == "__main__":
    T = 32
    alpha = 0.6
    cuts = np.linspace(0.0, 5.0, T).astype(np.float32)   # T cut points -> T mid values
    key = jax.random.PRNGKey(0)
    k_a, k_b = jax.random.split(key)

    # Single-tile case (N=8).
    phi_full, target_loghaz = _make_inputs(k_a, 8, T)
    out = loss_haz_cls_ind(phi_full, target_loghaz, cuts=cuts, alpha=alpha)
    out = jax.block_until_ready(out)
    ref = _reference(phi_full, target_loghaz, cuts, alpha)
    np.testing.assert_allclose(np.asarray(out), np.asarray(ref), rtol=1e-3, atol=1e-5)

    # Multi-tile case with a ragged last tile (N=20, tile_rows=8 -> 3 grid steps).
    phi_full2, target_loghaz2 = _make_inputs(k_b, 20, T)
    out2 = loss_haz_cls_ind(phi_full2, target_loghaz2, cuts=cuts, alpha=alpha, tile_rows=8)
    out2 = jax.block_until_ready(out2)
    ref2 = _reference(phi_full2, target_loghaz2, cuts, alpha)
    np.testing.assert_allclose(np.asarray(out2), np.asarray(ref2), rtol=1e-3, atol=1e-5)

    print("KERNEL_OK")
</pallas_src>

<mosaic_0001>
module attributes {stable_mosaic.version = 11 : i64} {
  func.func @_loss_haz_cls_ind_kernel(%arg0: i32, %arg1: memref<8x33xf32, #tpu.memory_space<vmem>>, %arg2: memref<8x4xf32, #tpu.memory_space<vmem>>, %arg3: memref<1x32xf32, #tpu.memory_space<vmem>>, %arg4: memref<32x32xf32, #tpu.memory_space<vmem>>, %arg5: memref<1x1x128xf32, #tpu.memory_space<vmem>>) attributes {dimension_semantics = [#tpu.dimension_semantics<parallel>], iteration_bounds = array<i64: 1>, scalar_prefetch = 0 : i64, scratch_operands = 0 : i64, tpu.core_type = #tpu.core_type<tc>, window_params = [{transform_indices = @transform_0, window_bounds = array<i64: 8, 33>}, {transform_indices = @transform_1, window_bounds = array<i64: 8, 4>}, {pipeline_mode = #tpu.pipeline_mode<synchronous>, transform_indices = @transform_2, window_bounds = array<i64: 1, 32>}, {pipeline_mode = #tpu.pipeline_mode<synchronous>, transform_indices = @transform_3, window_bounds = array<i64: 32, 32>}, {transform_indices = @transform_4, window_bounds = array<i64: 1, 1, 128>}]} {
    %c0 = arith.constant 0 : index
    %c0_0 = arith.constant 0 : index
    %0 = vector.load %arg1[%c0, %c0_0] : memref<8x33xf32, #tpu.memory_space<vmem>>, vector<8x33xf32>
    %c0_1 = arith.constant 0 : index
    %c0_2 = arith.constant 0 : index
    %1 = vector.load %arg2[%c0_1, %c0_2] : memref<8x4xf32, #tpu.memory_space<vmem>>, vector<8x4xf32>
    %c0_3 = arith.constant 0 : index
    %c0_4 = arith.constant 0 : index
    %2 = vector.load %arg3[%c0_3, %c0_4] : memref<1x32xf32, #tpu.memory_space<vmem>>, vector<1x32xf32>
    %c0_5 = arith.constant 0 : index
    %c0_6 = arith.constant 0 : index
    %3 = vector.load %arg4[%c0_5, %c0_6] : memref<32x32xf32, #tpu.memory_space<vmem>>, vector<32x32xf32>
    %4 = vector.extract_strided_slice %0 {offsets = [0, 0], sizes = [8, 32], strides = [1, 1]} : vector<8x33xf32> to vector<8x32xf32>
    %5 = vector.extract_strided_slice %0 {offsets = [0, 32], sizes = [8, 1], strides = [1, 1]} : vector<8x33xf32> to vector<8x1xf32>
    %6 = vector.extract_strided_slice %1 {offsets = [0, 0], sizes = [8, 1], strides = [1, 1]} : vector<8x4xf32> to vector<8x1xf32>
    %7 = arith.fptosi %6 : vector<8x1xf32> to vector<8x1xi32>
    %8 = vector.extract_strided_slice %1 {offsets = [0, 1], sizes = [8, 1], strides = [1, 1]} : vector<8x4xf32> to vector<8x1xf32>
    %9 = vector.extract_strided_slice %1 {offsets = [0, 2], sizes = [8, 1], strides = [1, 1]} : vector<8x4xf32> to vector<8x1xf32>
    %10 = vector.extract_strided_slice %1 {offsets = [0, 3], sizes = [8, 1], strides = [1, 1]} : vector<8x4xf32> to vector<8x1xf32>
    %c8_i32 = arith.constant 8 : i32
    %11 = arith.muli %arg0, %c8_i32 : i32
    %12 = tpu.iota {dimensions = array<i32: 0>} : vector<8x1xi32>
    %13 = vector.broadcast %11 : i32 to vector<8x1xi32>
    %14 = arith.addi %13, %12 : vector<8x1xi32>
    %c8_i32_7 = arith.constant 8 : i32
    %15 = vector.broadcast %c8_i32_7 : i32 to vector<8x1xi32>
    %16 = arith.cmpi slt, %14, %15 : vector<8x1xi32>
    %cst = arith.constant 0.000000e+00 : f32
    %17 = vector.broadcast %cst : f32 to vector<8x32xf32>
    %18 = arith.maximumf %4, %17 : vector<8x32xf32>
    %19 = math.absf %4 : vector<8x32xf32>
    %cst_8 = arith.constant 0.000000e+00 : f32
    %20 = vector.broadcast %cst_8 : f32 to vector<8x32xf32>
    %21 = arith.subf %20, %19 : vector<8x32xf32>
    %22 = math.exp %21 : vector<8x32xf32>
    %23 = math.log1p %22 : vector<8x32xf32>
    %24 = tpu.iota {dimensions = array<i32: 1>} : vector<8x32xi32>
    %25 = vector.broadcast %7 : vector<8x1xi32> to vector<8x32xi32>
    %26 = arith.cmpi eq, %24, %25 : vector<8x32xi32>
    %cst_9 = arith.constant 0.000000e+00 : f32
    %27 = vector.shape_cast %8 : vector<8x1xf32> to vector<8x1xf32>
    %28 = vector.broadcast %27 : vector<8x1xf32> to vector<8x32xf32>
    %29 = vector.broadcast %cst_9 : f32 to vector<8x32xf32>
    %30 = arith.select %26, %28, %29 : vector<8x32xi1>, vector<8x32xf32>
    %31 = arith.mulf %4, %30 : vector<8x32xf32>
    %32 = arith.subf %18, %31 : vector<8x32xf32>
    %33 = arith.addf %32, %23 : vector<8x32xf32>
    %34 = vector.broadcast %7 : vector<8x1xi32> to vector<8x32xi32>
    %35 = arith.cmpi sle, %24, %34 : vector<8x32xi32>
    %36 = vector.broadcast %16 : vector<8x1xi1> to vector<8x32xi1>
    %37 = arith.andi %35, %36 : vector<8x32xi1>
    %cst_10 = arith.constant 0.000000e+00 : f32
    %38 = vector.broadcast %cst_10 : f32 to vector<8x32xf32>
    %39 = arith.select %37, %33, %38 : vector<8x32xi1>, vector<8x32xf32>
    %40 = vector.shape_cast %39 : vector<8x32xf32> to vector<1x8x32xf32>
    %cst_11 = arith.constant dense<0.000000e+00> : vector<1xf32>
    %41 = vector.multi_reduction <add>, %40, %cst_11 [1, 2] : vector<1x8x32xf32> to vector<1xf32>
    %42 = vector.shape_cast %41 : vector<1xf32> to vector<1x1x1xf32>
    %43 = vector.extract %42[0, 0, 0] : f32 from vector<1x1x1xf32>
    %44 = arith.addf %18, %23 : vector<8x32xf32>
    %cst_12 = arith.constant 0.000000e+00 : f32
    %45 = vector.broadcast %cst_12 : f32 to vector<8x32xf32>
    %46 = arith.subf %45, %44 : vector<8x32xf32>
    %cst_13 = arith.constant 0.000000e+00 : f32
    %47 = vector.broadcast %cst_13 : f32 to vector<8x32xf32>
    %48 = arith.minimumf %4, %47 : vector<8x32xf32>
    %49 = arith.subf %48, %23 : vector<8x32xf32>
    %cst_14 = arith.constant dense<0.000000e+00> : vector<8x32xf32>
    %50 = tpu.matmul %46, %3, %cst_14 {dimension_numbers = #tpu.dot_dimension_numbers<[1], [0], [0], [1], [0, 0, 1, 1], [], []>} : vector<8x32xf32>, vector<32x32xf32>, vector<8x32xf32> -> vector<8x32xf32>
    %51 = arith.addf %49, %50 : vector<8x32xf32>
    %52 = math.exp %51 : vector<8x32xf32>
    %53 = vector.broadcast %2 : vector<1x32xf32> to vector<8x32xf32>
    %54 = arith.mulf %52, %53 : vector<8x32xf32>
    %cst_15 = arith.constant dense<0.000000e+00> : vector<8xf32>
    %55 = vector.multi_reduction <add>, %54, %cst_15 [1] : vector<8x32xf32> to vector<8xf32>
    %56 = vector.shape_cast %55 : vector<8xf32> to vector<8x1xf32>
    %cst_16 = arith.constant 0.000000e+00 : f32
    %57 = vector.broadcast %cst_16 : f32 to vector<8x1xf32>
    %58 = arith.cmpf ogt, %10, %57 : vector<8x1xf32>
    %59 = arith.andi %58, %16 : vector<8x1xi1>
    %cst_17 = arith.constant 1.000000e+00 : f32
    %cst_18 = arith.constant 0.000000e+00 : f32
    %60 = vector.broadcast %cst_17 : f32 to vector<8x1xf32>
    %61 = vector.broadcast %cst_18 : f32 to vector<8x1xf32>
    %62 = arith.select %59, %60, %61 : vector<8x1xi1>, vector<8x1xf32>
    %63 = vector.shape_cast %62 : vector<8x1xf32> to vector<1x8x1xf32>
    %cst_19 = arith.constant dense<0.000000e+00> : vector<1xf32>
    %64 = vector.multi_reduction <add>, %63, %cst_19 [1, 2] : vector<1x8x1xf32> to vector<1xf32>
    %65 = vector.shape_cast %64 : vector<1xf32> to vector<1x1x1xf32>
    %66 = vector.extract %65[0, 0, 0] : f32 from vector<1x1x1xf32>
    %67 = arith.subf %5, %9 : vector<8x1xf32>
    %68 = arith.mulf %67, %67 : vector<8x1xf32>
    %cst_20 = arith.constant 0.000000e+00 : f32
    %69 = vector.broadcast %cst_20 : f32 to vector<8x1xf32>
    %70 = arith.select %59, %68, %69 : vector<8x1xi1>, vector<8x1xf32>
    %71 = vector.shape_cast %70 : vector<8x1xf32> to vector<1x8x1xf32>
    %cst_21 = arith.constant dense<0.000000e+00> : vector<1xf32>
    %72 = vector.multi_reduction <add>, %71, %cst_21 [1, 2] : vector<1x8x1xf32> to vector<1xf32>
    %73 = vector.shape_cast %72 : vector<1xf32> to vector<1x1x1xf32>
    %74 = vector.extract %73[0, 0, 0] : f32 from vector<1x1x1xf32>
    %75 = arith.subf %56, %9 : vector<8x1xf32>
    %76 = arith.mulf %75, %75 : vector<8x1xf32>
    %cst_22 = arith.constant 0.000000e+00 : f32
    %77 = vector.broadcast %cst_22 : f32 to vector<8x1xf32>
    %78 = arith.select %59, %76, %77 : vector<8x1xi1>, vector<8x1xf32>
    %79 = vector.shape_cast %78 : vector<8x1xf32> to vector<1x8x1xf32>
    %cst_23 = arith.constant dense<0.000000e+00> : vector<1xf32>
    %80 = vector.multi_reduction <add>, %79, %cst_23 [1, 2] : vector<1x8x1xf32> to vector<1xf32>
    %81 = vector.shape_cast %80 : vector<1xf32> to vector<1x1x1xf32>
    %82 = vector.extract %81[0, 0, 0] : f32 from vector<1x1x1xf32>
    %83 = tpu.iota {dimensions = array<i32: 2>} : vector<1x1x128xi32>
    %c0_i32 = arith.constant 0 : i32
    %84 = vector.broadcast %c0_i32 : i32 to vector<1x1x128xi32>
    %85 = arith.cmpi eq, %83, %84 : vector<1x1x128xi32>
    %c1_i32 = arith.constant 1 : i32
    %86 = vector.broadcast %c1_i32 : i32 to vector<1x1x128xi32>
    %87 = arith.cmpi eq, %83, %86 : vector<1x1x128xi32>
    %c2_i32 = arith.constant 2 : i32
    %88 = vector.broadcast %c2_i32 : i32 to vector<1x1x128xi32>
    %89 = arith.cmpi eq, %83, %88 : vector<1x1x128xi32>
    %c3_i32 = arith.constant 3 : i32
    %90 = vector.broadcast %c3_i32 : i32 to vector<1x1x128xi32>
    %91 = arith.cmpi eq, %83, %90 : vector<1x1x128xi32>
    %cst_24 = arith.constant 0.000000e+00 : f32
    %92 = vector.broadcast %66 : f32 to vector<1x1x128xf32>
    %93 = vector.broadcast %cst_24 : f32 to vector<1x1x128xf32>
    %94 = arith.select %91, %92, %93 : vector<1x1x128xi1>, vector<1x1x128xf32>
    %95 = vector.broadcast %82 : f32 to vector<1x1x128xf32>
    %96 = arith.select %89, %95, %94 : vector<1x1x128xi1>, vector<1x1x128xf32>
    %97 = vector.broadcast %74 : f32 to vector<1x1x128xf32>
    %98 = arith.select %87, %97, %96 : vector<1x1x128xi1>, vector<1x1x128xf32>
    %99 = vector.broadcast %43 : f32 to vector<1x1x128xf32>
    %100 = arith.select %85, %99, %98 : vector<1x1x128xi1>, vector<1x1x128xf32>
    %c0_25 = arith.constant 0 : index
    %c0_26 = arith.constant 0 : index
    %c0_27 = arith.constant 0 : index
    %101 = vector.load %arg5[%c0_25, %c0_26, %c0_27] : memref<1x1x128xf32, #tpu.memory_space<vmem>>, vector<1x1x128xf32>
    tpu.vector_store %arg5[%c0_25, %c0_26, %c0_27], %100 {strides = array<i32>} : memref<1x1x128xf32, #tpu.memory_space<vmem>>, vector<1x1x128xf32>,
    return
  }
  func.func @transform_0(%arg0: i32) -> (i32, i32) {
    %c0_i32 = arith.constant 0 : i32
    %c0_i32_0 = arith.constant 0 : i32
    return %arg0, %c0_i32 : i32, i32
  }
  func.func @transform_1(%arg0: i32) -> (i32, i32) {
    %c0_i32 = arith.constant 0 : i32
    %c0_i32_0 = arith.constant 0 : i32
    return %arg0, %c0_i32 : i32, i32
  }
  func.func @transform_2(%arg0: i32) -> (i32, i32) {
    %c0_i32 = arith.constant 0 : i32
    %c0_i32_0 = arith.constant 0 : i32
    %c0_i32_1 = arith.constant 0 : i32
    return %c0_i32, %c0_i32_0 : i32, i32
  }
  func.func @transform_3(%arg0: i32) -> (i32, i32) {
    %c0_i32 = arith.constant 0 : i32
    %c0_i32_0 = arith.constant 0 : i32
    %c0_i32_1 = arith.constant 0 : i32
    return %c0_i32, %c0_i32_0 : i32, i32
  }
  func.func @transform_4(%arg0: i32) -> (i32, i32, i32) {
    %c0_i32 = arith.constant 0 : i32
    %c0_i32_0 = arith.constant 0 : i32
    %c0_i32_1 = arith.constant 0 : i32
    return %arg0, %c0_i32, %c0_i32_0 : i32, i32, i32
  }
}

</mosaic_0001>

<llo_original>
// kernel: tpu_custom_call.1
$region0: #{tpu_custom_call.1}
  #allocation0 [shape = 'u32[]', space=smem, size = 0x4, offset = 0x4, fixed_abs, tag = 'smem constant byte address 0x4 - core index']
  #allocation1 [shape = 'u32[144,128]{1,0:T(1,128)}', space=vmem, size = 0x12000, scoped, tag = 'internal scratch']
  %s0 = inlined_call_operand.vmem [shape: f32[8,33], index: 0, kind: input, shape index: {}]
  %s1 = inlined_call_operand.vmem [shape: f32[8,4], index: 1, kind: input, shape index: {}]
  %s2 = inlined_call_operand.vmem [shape: f32[1,32], index: 2, kind: input, shape index: {}]
  %s3 = inlined_call_operand.hbm [shape: f32[32,32], index: 3, kind: input, shape index: {}]
  %s4 = inlined_call_operand.hbm [shape: f32[1,1,128], index: 4, kind: output, shape index: {}]
  %s5 = sld [smem:[#allocation0]]
  $region30: #{tpu_custom_call.1} parent=0
    _
  %s7 = ssub.s32 1, %s5
  %s8 = scalar_select 0, %s7, %s5
  $region1: #{tpu_custom_call.1} parent=0
    #allocation2 [shape = 'u8[16384]{0}', space=vmem, size = 0x4000, scoped, tag = 'input window, operand 3, single buffered']
    #allocation3 [shape = 's32[1]{0}', space=sflag, size = 0x4, scoped, tag = 'scoped memory for tpu_custom_call.1']
    #allocation4 [shape = 's32[1]{0}', space=sflag, size = 0x4, scoped, tag = 'scoped memory for tpu_custom_call.1']
    #allocation5 [shape = 'u8[512]{0}', space=vmem, size = 0x400, scoped, tag = 'output window, operand 0, single buffered']
    %9 = vsyncpa [#allocation3], 0
    %10 = vsyncpa [#allocation4], 0
    // Predicated region
    $region2: #{tpu_custom_call.1} parent=1 // pred_check
      _
    $region3: #{tpu_custom_call.1} parent=1 // pred_check_branch
      %12 = sbr.rel (0) target = $region5
    $region4: #{tpu_custom_call.1} parent=1 // pred_region
      _
    $region5: #{tpu_custom_call.1} parent=1 // pred_fallthru
      _
    // Predicated region
    $region6: #{tpu_custom_call.1} parent=1 // pred_check
      _
    $region7: #{tpu_custom_call.1} parent=1 // pred_check_branch
      %14 = sbr.rel (0) target = $region9
    $region8: #{tpu_custom_call.1} parent=1 // pred_region
      _
    $region9: #{tpu_custom_call.1} parent=1 // pred_fallthru
      _
    // Predicated region
    $region10: #{tpu_custom_call.1} parent=1 // pred_check
      _
    $region11: #{tpu_custom_call.1} parent=1 // pred_check_branch
      %16 = sbr.rel (0) target = $region13
    $region12: #{tpu_custom_call.1} parent=1 // pred_region
      _
    $region13: #{tpu_custom_call.1} parent=1 // pred_fallthru
      _
    // Predicated region
    $region14: #{tpu_custom_call.1} parent=1 // pred_check
      _
    $region15: #{tpu_custom_call.1} parent=1 // pred_check_branch
      %18 = sbr.rel (0) target = $region17
    $region16: #{tpu_custom_call.1} parent=1 // pred_region
      %s20 = ssub.s32 512, 512
      %21 = vsyncadd [#allocation3], %s20
      %s22 = sshll.u32 [#allocation2], 4
      %s23 = int_to_ptr.vmem [resolvable:$true] %s22
      %28 = dma.hbm_to_vmem [thread:$0]  %s3, 512, %s23, [#allocation3], 128, 128, 8
    $region17: #{tpu_custom_call.1} parent=1 // pred_fallthru
      _
    // Predicated region
    $region18: #{tpu_custom_call.1} parent=1 // pred_check
      _
    $region19: #{tpu_custom_call.1} parent=1 // pred_check_branch
      %30 = sbr.rel (0) target = $region21
    $region20: #{tpu_custom_call.1} parent=1 // pred_region
      %31 = dma.done [#allocation3], 512
    $region21: #{tpu_custom_call.1} parent=1 // pred_fallthru
      _
    %v32 = vld [vmem:[%s0] sm:$0xff]
    %v33 = vld [vmem:[%s1] sm:$0xff]
    %v34 = vld [vmem:[%s2] sm:$0x1]
    %v35 = vld [vmem:[#allocation2] sm:$0xff]
    %v36 = vld [vmem:[#allocation2 + $0x8] sm:$0xff]
    %v37 = vld [vmem:[#allocation2 + $0x10] sm:$0xff]
    %v38 = vld [vmem:[#allocation2 + $0x18] sm:$0xff]
    %v39 = vcvt.f32.s32.to.zero.pseudo %v33
    %s40 = smul.u32 0, 8
    %v41 = vlaneseq
    %v42 = vshrl.u32 %v41, 7
    %v43 = vstv %s40
    %v44 = vadd.s32 %v43, %v42
    %vm45 = vcmp.lt.s32.totalorder %v44, 8
    %v46 = vmax.f32 %v32, 0.0
    %v47 = vand.u32 2147483647, %v32
    %v48 = vsub.f32 0.0, %v47
    %v49 = vmul.f32 %v48, 1.442695
    %v50 = vpow.pop %v49
    %v51 = vadd.f32 %v50, 1.0
    %v52 = vlog2.pop %v51
    %v53 = vmul.f32 %v52, 0.6931472
    %v54 = vmul.f32 -0.5, %v50
    %v55 = vadd.f32 %v54, 1.0
    %v56 = vmul.f32 %v55, %v50
    %v57 = vand.u32 2147483647, %v50
    %vm58 = vcmp.lt.f32.partialorder %v57, 0.0004427343
    %v59 = vsel %vm58, %v56, %v53
    %v60 = vlaneseq
    %v61 = vand.u32 %v60, 127
    %62 = vset.pattern.permute.xlu0 0
    %63 = vperm.xlu0 %62, %v39
    %v64 = vpop.permute.xlu0 %63
    %vm65 = vcmp.eq.s32.totalorder %v61, %v64
    %67 = vset.pattern.permute.xlu0 1
    %68 = vperm.xlu0 %67, %v33
    %v69 = vpop.permute.xlu0 %68
    %v71 = vsel %vm65, %v69, 0.0
    %v72 = vmul.f32 %v32, %v71
    %v73 = vsub.f32 %v46, %v72
    %v74 = vadd.f32 %v73, %v59
    %vm75 = vcmp.le.s32.totalorder %v61, %v64
    %v76 = vsel %vm45, 1, 0
    %vm77 = vcmp.eq.s32.totalorder %v76, 1
    %vm78 = vmand %vm75, %vm77
    %v79 = vsel %vm78, %v74, 0.0
    %vm80 = vcmask 261120
    %v81 = vsel %vm80, %v79, 0.0
    %82 = vadd.xlane.f32.xlu0 %v81
    %v83 = vpop.xlane.xlu0 %82
    %v84 = vrot.slane %v83, 4
    %v85 = vadd.f32 %v83, %v84
    %v86 = vrot.slane %v85, 2
    %v87 = vadd.f32 %v85, %v86
    %v88 = vrot.slane %v87, 1
    %v89 = vadd.f32 %v87, %v88
    %s90 = vtos %v89
    %v91 = vadd.f32 %v46, %v59
    %v92 = vsub.f32 0.0, %v91
    %v93 = vmin.f32 %v32, 0.0
    %v94 = vsub.f32 %v93, %v59
    %v96 = vsel %vm80, %v92, 0
    %98 = vmatprep.subr.mxu0 0.0
    %99 = vmatpush1.msra.mxu0 0.0
    %100 = vmatprep.subr.mxu0 0.0
    %101 = vmatpush1.msra.mxu0 0.0
    %102 = vmatprep.subr.mxu0 0.0
    %103 = vmatpush1.msra.mxu0 0.0
    %104 = vmatprep.subr.mxu0 0.0
    %105 = vmatpush1.msra.mxu0 0.0
    %106 = vmatprep.subr.mxu0 0.0
    %107 = vmatpush1.msra.mxu0 0.0
    %108 = vmatprep.subr.mxu0 0.0
    %109 = vmatpush1.msra.mxu0 0.0
    %110 = vmatprep.subr.mxu0 0.0
    %111 = vmatpush1.msra.mxu0 0.0
    %112 = vmatprep.subr.mxu0 0.0
    %113 = vmatpush1.msra.mxu0 0.0
    %114 = vmatprep.subr.mxu0 0.0
    %115 = vmatpush1.msra.mxu0 0.0
    %116 = vmatprep.subr.mxu0 0.0
    %117 = vmatpush1.msra.mxu0 0.0
    %118 = vmatprep.subr.mxu0 0.0
    %119 = vmatpush1.msra.mxu0 0.0
    %120 = vmatprep.subr.mxu0 0.0
    %121 = vmatpush1.msra.mxu0 0.0
    %122 = vmatprep.subr.mxu0 0.0
    %123 = vmatpush1.msra.mxu0 %v38
    %124 = vmatprep.subr.mxu0 0.0
    %125 = vmatpush1.msra.mxu0 %v37
    %126 = vmatprep.subr.mxu0 0.0
    %127 = vmatpush1.msra.mxu0 %v36
    %128 = vmatprep.subr.mxu0 0.0
    %129 = vmatpush1.msra.mxu0 %v35
    %130 = vmatprep.subr.mxu0 0.0
    %131 = vmatpush2.msra.mxu0 0.0
    %132 = vmatprep.subr.mxu0 0.0
    %133 = vmatpush2.msra.mxu0 0.0
    %134 = vmatprep.subr.mxu0 0.0
    %135 = vmatpush2.msra.mxu0 0.0
    %136 = vmatprep.subr.mxu0 0.0
    %137 = vmatpush2.msra.mxu0 0.0
    %138 = vmatprep.subr.mxu0 0.0
    %139 = vmatpush2.msra.mxu0 0.0
    %140 = vmatprep.subr.mxu0 0.0
    %141 = vmatpush2.msra.mxu0 0.0
    %142 = vmatprep.subr.mxu0 0.0
    %143 = vmatpush2.msra.mxu0 0.0
    %144 = vmatprep.subr.mxu0 0.0
    %145 = vmatpush2.msra.mxu0 0.0
    %146 = vmatprep.subr.mxu0 0.0
    %147 = vmatpush2.msra.mxu0 0.0
    %148 = vmatprep.subr.mxu0 0.0
    %149 = vmatpush2.msra.mxu0 0.0
    %150 = vmatprep.subr.mxu0 0.0
    %151 = vmatpush2.msra.mxu0 0.0
    %152 = vmatprep.subr.mxu0 0.0
    %153 = vmatpush2.msra.mxu0 0.0
    %154 = vmatprep.subr.mxu0 0.0
    %155 = vmatpush2.msra.mxu0 0.0
    %156 = vmatprep.subr.mxu0 0.0
    %157 = vmatpush2.msra.mxu0 0.0
    %158 = vmatprep.subr.mxu0 0.0
    %159 = vmatpush2.msra.mxu0 0.0
    %160 = vmatprep.subr.mxu0 0.0
    %161 = vmatpush2.msra.mxu0 0.0
    %162 = vmatprep.mubr.f32.mxu0 0.0
    %163 = vmatmul.mubr.f32.gmra.mxu0 %v96
    %v164 = vpop.f32.mrf.mxu0
    %v165 = vadd.f32 0.0, %v164
    %v166 = vpop.f32.mrf.mxu0
    %167 = vdwg.mxu0
    %v168 = vadd.f32 %v94, %v165
    %v169 = vmul.f32 %v168, 1.442695
    %v170 = vpow.pop %v169
    %v172 = vlaneseq
    %v173 = vshrl.u32 %v172, 7
    %v174 = vsub.s32 0, %v173
    %v175 = vrot.slane %v34, %v174
    %v177 = vmul.f32 %v170, %v175
    %v178 = vsel %vm80, %v177, 0.0
    %179 = vadd.xlane.f32.xlu0 %v178
    %v180 = vpop.xlane.xlu0 %179
    %vm181 = vcmp.gt.f32.partialorder %v33, 0.0
    %vm182 = vmand %vm181, %vm45
    %v183 = vsel %vm182, 1.0, 0.0
    %185 = vrot.lane.b32.xlu0 %v183, 125
    %v186 = vpop.permute.xlu0 %185
    %vm188 = vcmask 7168
    %v189 = vsel %vm188, %v186, 0.0
    %190 = vadd.xlane.f32.xlu0 %v189
    %v191 = vpop.xlane.xlu0 %190
    %v192 = vrot.slane %v191, 4
    %v193 = vadd.f32 %v191, %v192
    %v194 = vrot.slane %v193, 2
    %v195 = vadd.f32 %v193, %v194
    %v196 = vrot.slane %v195, 1
    %v197 = vadd.f32 %v195, %v196
    %s198 = vtos %v197
    %199 = vrot.lane.b32.xlu0 %v33, 30
    %v200 = vpop.permute.xlu0 %199
    %v202 = vsub.f32 %v32, %v200
    %v203 = vmul.f32 %v202, %v202
    %205 = vrot.lane.b32.xlu0 %v203, 99
    %v206 = vpop.permute.xlu0 %205
    %v208 = vsel %vm182, %v206, 0.0
    %210 = vrot.lane.b32.xlu0 %v208, 125
    %v211 = vpop.permute.xlu0 %210
    %v213 = vsel %vm188, %v211, 0.0
    %214 = vadd.xlane.f32.xlu0 %v213
    %v215 = vpop.xlane.xlu0 %214
    %v216 = vrot.slane %v215, 4
    %v217 = vadd.f32 %v215, %v216
    %v218 = vrot.slane %v217, 2
    %v219 = vadd.f32 %v217, %v218
    %v220 = vrot.slane %v219, 1
    %v221 = vadd.f32 %v219, %v220
    %s222 = vtos %v221
    %v223 = vsub.f32 %v180, %v33
    %v224 = vmul.f32 %v223, %v223
    %226 = vrot.lane.b32.xlu0 %v224, 1
    %v227 = vpop.permute.xlu0 %226
    %v229 = vsel %vm182, %v227, 0.0
    %231 = vrot.lane.b32.xlu0 %v229, 125
    %v232 = vpop.permute.xlu0 %231
    %v234 = vsel %vm188, %v232, 0.0
    %235 = vadd.xlane.f32.xlu0 %v234
    %v236 = vpop.xlane.xlu0 %235
    %v237 = vrot.slane %v236, 4
    %v238 = vadd.f32 %v236, %v237
    %v239 = vrot.slane %v238, 2
    %v240 = vadd.f32 %v238, %v239
    %v241 = vrot.slane %v240, 1
    %v242 = vadd.f32 %v240, %v241
    %s243 = vtos %v242
    %vm244 = vcmp.eq.s32.totalorder %v61, 0
    %vm245 = vcmp.eq.s32.totalorder %v61, 1
    %vm246 = vcmp.eq.s32.totalorder %v61, 2
    %vm247 = vcmp.eq.s32.totalorder %v61, 3
    %v248 = vstv %s198
    %v249 = vsel %vm247, %v248, 0.0
    %v250 = vstv %s243
    %v251 = vsel %vm246, %v250, %v249
    %v252 = vstv %s222
    %v253 = vsel %vm245, %v252, %v251
    %v254 = vstv %s90
    %v255 = vsel %vm244, %v254, %v253
    %256 = vst [vmem:[#allocation5] sm:$0x1] %v255
    // Predicated region
    $region22: #{tpu_custom_call.1} parent=1 // pred_check
      _
    $region23: #{tpu_custom_call.1} parent=1 // pred_check_branch
      %258 = sbr.rel (0) target = $region25
    $region24: #{tpu_custom_call.1} parent=1 // pred_region
      %s260 = ssub.s32 16, 16
      %261 = vsyncadd [#allocation4], %s260
      %s263 = sshll.u32 [#allocation5], 4
      %s264 = int_to_ptr.vmem [resolvable:$true] %s263
      %266 = dma.vmem_to_hbm [thread:$0]  %s264, 16, %s4, [#allocation4]
    $region25: #{tpu_custom_call.1} parent=1 // pred_fallthru
      _
    // Predicated region
    $region26: #{tpu_custom_call.1} parent=1 // pred_check
      _
    $region27: #{tpu_custom_call.1} parent=1 // pred_check_branch
      %268 = sbr.rel (0) target = $region29
    $region28: #{tpu_custom_call.1} parent=1 // pred_region
      %269 = dma.done [#allocation4], 16
    $region29: #{tpu_custom_call.1} parent=1 // pred_fallthru
      _
    %270 = vsyncpa [#allocation3], 1
    %271 = vsyncpa [#allocation4], 1

</llo_original>
